<compile_context>
chip_gen: v6e
topology: v6e:2x2x1
jax: 0.10.0
libtpu: 0.0.40
codegen_flags: <defaults>
</compile_context>

<pallas_src>
import functools
import math

import numpy as np

import jax
import jax.numpy as jnp
from jax.experimental import pallas as pl
from jax.experimental.pallas import tpu as pltpu


# ----------------------------- Pallas kernel -------------------------------


def _erase_body(params_ref, img_ref, out_ref, value_for_channel):
    """Erase rows [i0, i0+h) x cols [j0, j0+w) of this (1, C, TH, W) block."""
    # params (SMEM, int32): [i0, j0, h, w, first_row_tile, last_tile - first_tile]
    i0 = params_ref[0]
    j0 = params_ref[1]
    h = params_ref[2]
    w = params_ref[3]

    _, C, TH, W = img_ref.shape
    # Absolute row offset of this block (must match the clamped index_map).
    blk = params_ref[4] + jnp.minimum(pl.program_id(1), params_ref[5])
    row0 = blk * TH

    # One small (TH, W) iota pair shared across channels (instead of full
    # (C, TH, W) int32 temporaries).
    rows = row0 + jax.lax.broadcasted_iota(jnp.int32, (TH, W), 0)
    cols = jax.lax.broadcasted_iota(jnp.int32, (TH, W), 1)
    inside = (rows >= i0) & (rows < i0 + h) & (cols >= j0) & (cols < j0 + w)

    for c in range(C):
        out_ref[0, c] = jnp.where(inside, value_for_channel(c), img_ref[0, c])


def _erase_impl(params, img, value, *, row_tile, fill):
    """Erase a rectangle; only row tiles overlapping it are read/written.

    value: None (constant `fill` baked into the kernel) or a (1, C, H, W) array
           (per-pixel fill, e.g. value='random').
    fill:  None or a static tuple of 1 / C python floats.
    """
    N, C, H, W = img.shape
    TH = row_tile
    R = H // TH

    def blk_map(n, r, p):
        # Clamp to the last row tile overlapping the erased rows: grid steps
        # past the rectangle revisit the same block index, so Pallas skips
        # their input fetch and output writeback entirely.
        return (n, 0, p[4] + jnp.minimum(r, p[5]), 0)

    img_spec = pl.BlockSpec((1, C, TH, W), blk_map)
    in_specs = [img_spec]
    operands = [params, img]

    if value is None:
        def kernel(params_ref, img_ref, out_ref):
            _erase_body(params_ref, img_ref, out_ref,
                        lambda c: fill[c % len(fill)])
    else:
        in_specs.append(
            pl.BlockSpec((1, C, TH, W),
                         lambda n, r, p: (0, 0, p[4] + jnp.minimum(r, p[5]), 0)))
        operands.append(value)

        def kernel(params_ref, img_ref, val_ref, out_ref):
            _erase_body(params_ref, img_ref, out_ref, lambda c: val_ref[0, c])

    return pl.pallas_call(
        kernel,
        out_shape=jax.ShapeDtypeStruct(img.shape, img.dtype),
        grid_spec=pltpu.PrefetchScalarGridSpec(
            num_scalar_prefetch=1,
            grid=(N, R),
            in_specs=in_specs,
            out_specs=img_spec,
        ),
        # Alias the image into the output: row tiles outside the erased range
        # are never touched by the kernel and keep their original contents.
        input_output_aliases={1: 0},
        compiler_params=pltpu.CompilerParams(
            dimension_semantics=("parallel", "arbitrary")),
    )(*operands)


_erase_jit = jax.jit(_erase_impl, static_argnames=("row_tile", "fill"))
# In-place flavor: donates the input image so the alias is honored without a
# defensive copy (mirrors torchvision's inplace=True).
_erase_jit_donate = jax.jit(_erase_impl, static_argnames=("row_tile", "fill"),
                            donate_argnums=(1,))


def _pick_row_tile(H, C, W, itemsize):
    """Row tile TH for a (1, C, TH, W) block: divides H, multiple of 8
    (sublane rule), block <= ~1 MiB (bounds VMEM incl. v7x's 64 MiB), and
    leaves >= ~4 row tiles when possible so the restricted row range can
    actually skip untouched rows."""
    if H % 8 != 0:
        return H  # single row tile; block dim equals the full array dim
    row_bytes = max(1, C * W * itemsize)
    max_rows_by_bytes = max(8, (1 << 20) // row_bytes)
    best = 8
    for th in range(8, H + 1, 8):
        if H % th != 0 or th > max_rows_by_bytes:
            continue
        if th * 4 > max(H, 32):  # keep at least ~4 tiles unless H is tiny
            continue
        best = th
    return best


def erase(img, i, j, h, w, v, inplace=False):
    """Functional erase (mirror of torchvision.transforms.functional.erase).

    img: (N, C, H, W) array.
    v:   tuple/list of 1 or C floats (constant fill, compiled into the kernel)
         OR an array fill of shape (1, C, H, W) (per-pixel values).
    """
    N, C, H, W = img.shape
    i, j, h, w = int(i), int(j), int(h), int(w)
    if h <= 0 or w <= 0:
        return img
    th = _pick_row_tile(H, C, W, jnp.dtype(img.dtype).itemsize)
    num_tiles = H // th
    first = max(0, min(i // th, num_tiles - 1))
    last = max(first, min((i + h - 1) // th, num_tiles - 1))
    params = jnp.asarray([i, j, h, w, first, last - first], dtype=jnp.int32)
    fn = _erase_jit_donate if inplace else _erase_jit
    if isinstance(v, (tuple, list)):
        return fn(params, img, None, row_tile=th,
                  fill=tuple(float(x) for x in v))
    value = jnp.asarray(v, dtype=img.dtype)
    if value.shape != (1, C, H, W):
        value = jnp.broadcast_to(value, (1, C, H, W))
    return fn(params, img, value, row_tile=th, fill=None)


# ----------------------- Random parameter sampling --------------------------


@functools.partial(jax.jit,
                   static_argnames=("height", "width", "p", "scale", "ratio"))
def _sample_params(key, *, height, width, p, scale, ratio):
    """Coin flip + torchvision's 10-attempt rejection loop, fully on device.

    Returns int32[5]: [apply, i, j, h, w].
    """
    area = height * width
    log_r0, log_r1 = math.log(ratio[0]), math.log(ratio[1])
    kp, kloop = jax.random.split(key)
    coin = jax.random.uniform(kp, ()) < p

    def body(_, carry):
        key, found, i, j, h, w = carry
        key, k1, k2, ki, kj = jax.random.split(key, 5)
        erase_area = area * jax.random.uniform(
            k1, (), minval=scale[0], maxval=scale[1])
        aspect = jnp.exp(jax.random.uniform(
            k2, (), minval=log_r0, maxval=log_r1))
        h_t = jnp.round(jnp.sqrt(erase_area * aspect)).astype(jnp.int32)
        w_t = jnp.round(jnp.sqrt(erase_area / aspect)).astype(jnp.int32)
        ok = (h_t < height) & (w_t < width)
        i_t = jax.random.randint(ki, (), 0, jnp.maximum(height - h_t + 1, 1),
                                 dtype=jnp.int32)
        j_t = jax.random.randint(kj, (), 0, jnp.maximum(width - w_t + 1, 1),
                                 dtype=jnp.int32)
        take = ok & jnp.logical_not(found)
        i = jnp.where(take, i_t, i)
        j = jnp.where(take, j_t, j)
        h = jnp.where(take, h_t, h)
        w = jnp.where(take, w_t, w)
        return (key, found | ok, i, j, h, w)

    zero = jnp.int32(0)
    carry = (kloop, jnp.array(False), zero, zero, zero, zero)
    _, found, i, j, h, w = jax.lax.fori_loop(0, 10, body, carry)
    apply = (coin & found).astype(jnp.int32)
    return jnp.stack([apply, i, j, h, w])


# --------------------------- RandomErasing module ---------------------------


class RandomErasing:
    """JAX/Pallas port of torchvision RandomErasing forward semantics.

    Operates on batched NCHW images.  As with torchvision applied to a batched
    tensor, a single (i, j, h, w) rectangle is sampled per call and applied to
    every image in the batch.
    """

    def __init__(self, p=0.5, scale=(0.02, 0.33), ratio=(0.3, 3.3), value=0,
                 inplace=False):
        if not isinstance(value, (int, float, str, tuple, list)):
            raise TypeError(
                "Argument value should be either a number or str or a sequence")
        if isinstance(value, str) and value != "random":
            raise ValueError("If value is str, it should be 'random'")
        if not isinstance(scale, (tuple, list)):
            raise TypeError("Scale should be a sequence")
        if not isinstance(ratio, (tuple, list)):
            raise TypeError("Ratio should be a sequence")
        if scale[0] > scale[1] or ratio[0] > ratio[1]:
            raise ValueError("Scale and ratio should be of kind (min, max)")
        if scale[0] < 0 or scale[1] > 1:
            raise ValueError("Scale should be between 0 and 1")
        if p < 0 or p > 1:
            raise ValueError(
                "Random erasing probability should be between 0 and 1")
        self.p = p
        self.scale = scale
        self.ratio = ratio
        self.value = value
        self.inplace = inplace

    def __call__(self, img, key):
        """img: (N, C, H, W). Returns erased image (same shape/dtype)."""
        N, C, H, W = img.shape
        kp, kv = jax.random.split(key)
        params = np.asarray(_sample_params(
            kp, height=int(H), width=int(W), p=float(self.p),
            scale=(float(self.scale[0]), float(self.scale[1])),
            ratio=(float(self.ratio[0]), float(self.ratio[1]))))
        apply_flag, i, j, h, w = (int(x) for x in params)
        if not apply_flag or h <= 0 or w <= 0:
            # No-erase coin flip or infeasible rectangle (10 failed attempts):
            # skip the kernel entirely -- zero HBM traffic.
            return img

        if isinstance(self.value, str):  # 'random'
            # TODO(synk): generate the random fill in-kernel with
            # pltpu.prng_seed / pltpu.prng_random_bits instead of streaming a
            # full (1, C, H, W) slab; PyTorch also samples normals only for the
            # (C, h, w) patch (identical distribution on the erased region).
            v = jax.random.normal(kv, (1, C, H, W),
                                  dtype=jnp.float32).astype(img.dtype)
        else:
            if isinstance(self.value, (int, float)):
                vals = [float(self.value)]
            else:
                vals = [float(x) for x in self.value]
            if len(vals) not in (1, C):
                raise ValueError(
                    "If value is a sequence, it should have either a single "
                    f"value or {C} (number of input channels)")
            v = tuple(vals)

        return erase(img, i, j, h, w, v, inplace=self.inplace)


# --------------------------------- main -------------------------------------

if __name__ == "__main__":
    key = jax.random.PRNGKey(0)
    key, k_img, k_mod = jax.random.split(key, 3)

    N, C, H, W = 2, 4, 16, 16
    img = jax.random.normal(k_img, (N, C, H, W), dtype=jnp.float32)

    # 1) Deterministic exercise of the Pallas erase kernel + reference check.
    #    With H=16 the row tile is 8, the rectangle covers rows 3..6 only, so
    #    this also validates the alias + restricted-row-tile path: rows >= 8
    #    are never touched by the kernel and must keep their original values.
    i0, j0, eh, ew = 3, 5, 4, 6
    got = erase(img, i0, j0, eh, ew, (0.0,))
    rows = jnp.arange(H)[:, None]
    cols = jnp.arange(W)[None, :]
    mask = (rows >= i0) & (rows < i0 + eh) & (cols >= j0) & (cols < j0 + ew)
    ref = jnp.where(mask[None, None], jnp.zeros((), img.dtype), img)
    assert got.shape == img.shape and got.dtype == img.dtype
    assert bool(jnp.allclose(got, ref)), "erase kernel mismatch vs reference"

    # 2) Full RandomErasing forward (p=1.0 so the erase path is exercised
    #    deterministically; value=0 matches the torchvision default).
    transform = RandomErasing(p=1.0, scale=(0.02, 0.33), ratio=(0.3, 3.3),
                              value=0)
    out = transform(img, k_mod)
    out = jax.block_until_ready(out)

    assert out.shape == img.shape and out.dtype == img.dtype
    print("KERNEL_OK")
</pallas_src>

<mosaic_0001>
module attributes {stable_mosaic.version = 11 : i64} {
  func.func @kernel(%arg0: i32, %arg1: i32, %arg2: memref<6xi32, #tpu.memory_space<smem>>, %arg3: memref<1x4x8x16xf32, #tpu.memory_space<vmem>>, %arg4: memref<1x4x8x16xf32, #tpu.memory_space<vmem>>) attributes {dimension_semantics = [#tpu.dimension_semantics<parallel>, #tpu.dimension_semantics<arbitrary>], iteration_bounds = array<i64: 2, 2>, scalar_prefetch = 1 : i64, scratch_operands = 0 : i64, tpu.core_type = #tpu.core_type<tc>, window_params = [{transform_indices = @transform_0, window_bounds = array<i64: 1, 4, 8, 16>}, {transform_indices = @transform_1, window_bounds = array<i64: 1, 4, 8, 16>}]} {
    %c0 = arith.constant 0 : index
    %0 = memref.load %arg2[%c0] : memref<6xi32, #tpu.memory_space<smem>>
    %c1 = arith.constant 1 : index
    %1 = memref.load %arg2[%c1] : memref<6xi32, #tpu.memory_space<smem>>
    %c2 = arith.constant 2 : index
    %2 = memref.load %arg2[%c2] : memref<6xi32, #tpu.memory_space<smem>>
    %c3 = arith.constant 3 : index
    %3 = memref.load %arg2[%c3] : memref<6xi32, #tpu.memory_space<smem>>
    %c4 = arith.constant 4 : index
    %4 = memref.load %arg2[%c4] : memref<6xi32, #tpu.memory_space<smem>>
    %c5 = arith.constant 5 : index
    %5 = memref.load %arg2[%c5] : memref<6xi32, #tpu.memory_space<smem>>
    %6 = arith.minsi %arg1, %5 : i32
    %7 = arith.addi %4, %6 : i32
    %c8_i32 = arith.constant 8 : i32
    %8 = arith.muli %7, %c8_i32 : i32
    %9 = tpu.iota {dimensions = array<i32: 0>} : vector<8x16xi32>
    %10 = vector.broadcast %8 : i32 to vector<8x16xi32>
    %11 = arith.addi %10, %9 : vector<8x16xi32>
    %12 = tpu.iota {dimensions = array<i32: 1>} : vector<8x16xi32>
    %13 = vector.broadcast %0 : i32 to vector<8x16xi32>
    %14 = arith.cmpi sge, %11, %13 : vector<8x16xi32>
    %15 = arith.addi %0, %2 : i32
    %16 = vector.broadcast %15 : i32 to vector<8x16xi32>
    %17 = arith.cmpi slt, %11, %16 : vector<8x16xi32>
    %18 = arith.andi %14, %17 : vector<8x16xi1>
    %19 = vector.broadcast %1 : i32 to vector<8x16xi32>
    %20 = arith.cmpi sge, %12, %19 : vector<8x16xi32>
    %21 = arith.andi %18, %20 : vector<8x16xi1>
    %22 = arith.addi %1, %3 : i32
    %23 = vector.broadcast %22 : i32 to vector<8x16xi32>
    %24 = arith.cmpi slt, %12, %23 : vector<8x16xi32>
    %25 = arith.andi %21, %24 : vector<8x16xi1>
    %c0_0 = arith.constant 0 : index
    %c0_1 = arith.constant 0 : index
    %c0_2 = arith.constant 0 : index
    %c0_3 = arith.constant 0 : index
    %26 = vector.load %arg3[%c0_0, %c0_1, %c0_2, %c0_3] : memref<1x4x8x16xf32, #tpu.memory_space<vmem>>, vector<1x1x8x16xf32>
    %27 = vector.shape_cast %26 : vector<1x1x8x16xf32> to vector<8x16xf32>
    %cst = arith.constant 0.000000e+00 : f32
    %28 = vector.broadcast %cst : f32 to vector<8x16xf32>
    %29 = arith.select %25, %28, %27 : vector<8x16xi1>, vector<8x16xf32>
    %c0_4 = arith.constant 0 : index
    %c0_5 = arith.constant 0 : index
    %c0_6 = arith.constant 0 : index
    %c0_7 = arith.constant 0 : index
    %30 = vector.load %arg4[%c0_4, %c0_5, %c0_6, %c0_7] : memref<1x4x8x16xf32, #tpu.memory_space<vmem>>, vector<1x1x8x16xf32>
    %31 = vector.shape_cast %30 : vector<1x1x8x16xf32> to vector<8x16xf32>
    %32 = vector.shape_cast %29 : vector<8x16xf32> to vector<1x1x8x16xf32>
    tpu.vector_store %arg4[%c0_4, %c0_5, %c0_6, %c0_7], %32 {strides = array<i32>} : memref<1x4x8x16xf32, #tpu.memory_space<vmem>>, vector<1x1x8x16xf32>,
    %c0_8 = arith.constant 0 : index
    %c1_9 = arith.constant 1 : index
    %c0_10 = arith.constant 0 : index
    %c0_11 = arith.constant 0 : index
    %33 = vector.load %arg3[%c0_8, %c1_9, %c0_10, %c0_11] : memref<1x4x8x16xf32, #tpu.memory_space<vmem>>, vector<1x1x8x16xf32>
    %34 = vector.shape_cast %33 : vector<1x1x8x16xf32> to vector<8x16xf32>
    %cst_12 = arith.constant 0.000000e+00 : f32
    %35 = vector.broadcast %cst_12 : f32 to vector<8x16xf32>
    %36 = arith.select %25, %35, %34 : vector<8x16xi1>, vector<8x16xf32>
    %c0_13 = arith.constant 0 : index
    %c1_14 = arith.constant 1 : index
    %c0_15 = arith.constant 0 : index
    %c0_16 = arith.constant 0 : index
    %37 = vector.load %arg4[%c0_13, %c1_14, %c0_15, %c0_16] : memref<1x4x8x16xf32, #tpu.memory_space<vmem>>, vector<1x1x8x16xf32>
    %38 = vector.shape_cast %37 : vector<1x1x8x16xf32> to vector<8x16xf32>
    %39 = vector.shape_cast %36 : vector<8x16xf32> to vector<1x1x8x16xf32>
    tpu.vector_store %arg4[%c0_13, %c1_14, %c0_15, %c0_16], %39 {strides = array<i32>} : memref<1x4x8x16xf32, #tpu.memory_space<vmem>>, vector<1x1x8x16xf32>,
    %c0_17 = arith.constant 0 : index
    %c2_18 = arith.constant 2 : index
    %c0_19 = arith.constant 0 : index
    %c0_20 = arith.constant 0 : index
    %40 = vector.load %arg3[%c0_17, %c2_18, %c0_19, %c0_20] : memref<1x4x8x16xf32, #tpu.memory_space<vmem>>, vector<1x1x8x16xf32>
    %41 = vector.shape_cast %40 : vector<1x1x8x16xf32> to vector<8x16xf32>
    %cst_21 = arith.constant 0.000000e+00 : f32
    %42 = vector.broadcast %cst_21 : f32 to vector<8x16xf32>
    %43 = arith.select %25, %42, %41 : vector<8x16xi1>, vector<8x16xf32>
    %c0_22 = arith.constant 0 : index
    %c2_23 = arith.constant 2 : index
    %c0_24 = arith.constant 0 : index
    %c0_25 = arith.constant 0 : index
    %44 = vector.load %arg4[%c0_22, %c2_23, %c0_24, %c0_25] : memref<1x4x8x16xf32, #tpu.memory_space<vmem>>, vector<1x1x8x16xf32>
    %45 = vector.shape_cast %44 : vector<1x1x8x16xf32> to vector<8x16xf32>
    %46 = vector.shape_cast %43 : vector<8x16xf32> to vector<1x1x8x16xf32>
    tpu.vector_store %arg4[%c0_22, %c2_23, %c0_24, %c0_25], %46 {strides = array<i32>} : memref<1x4x8x16xf32, #tpu.memory_space<vmem>>, vector<1x1x8x16xf32>,
    %c0_26 = arith.constant 0 : index
    %c3_27 = arith.constant 3 : index
    %c0_28 = arith.constant 0 : index
    %c0_29 = arith.constant 0 : index
    %47 = vector.load %arg3[%c0_26, %c3_27, %c0_28, %c0_29] : memref<1x4x8x16xf32, #tpu.memory_space<vmem>>, vector<1x1x8x16xf32>
    %48 = vector.shape_cast %47 : vector<1x1x8x16xf32> to vector<8x16xf32>
    %cst_30 = arith.constant 0.000000e+00 : f32
    %49 = vector.broadcast %cst_30 : f32 to vector<8x16xf32>
    %50 = arith.select %25, %49, %48 : vector<8x16xi1>, vector<8x16xf32>
    %c0_31 = arith.constant 0 : index
    %c3_32 = arith.constant 3 : index
    %c0_33 = arith.constant 0 : index
    %c0_34 = arith.constant 0 : index
    %51 = vector.load %arg4[%c0_31, %c3_32, %c0_33, %c0_34] : memref<1x4x8x16xf32, #tpu.memory_space<vmem>>, vector<1x1x8x16xf32>
    %52 = vector.shape_cast %51 : vector<1x1x8x16xf32> to vector<8x16xf32>
    %53 = vector.shape_cast %50 : vector<8x16xf32> to vector<1x1x8x16xf32>
    tpu.vector_store %arg4[%c0_31, %c3_32, %c0_33, %c0_34], %53 {strides = array<i32>} : memref<1x4x8x16xf32, #tpu.memory_space<vmem>>, vector<1x1x8x16xf32>,
    return
  }
  func.func @transform_0(%arg0: i32, %arg1: i32, %arg2: memref<6xi32, #tpu.memory_space<smem>>) -> (i32, i32, i32, i32) {
    %c4 = arith.constant 4 : index
    %0 = memref.load %arg2[%c4] : memref<6xi32, #tpu.memory_space<smem>>
    %c5 = arith.constant 5 : index
    %1 = memref.load %arg2[%c5] : memref<6xi32, #tpu.memory_space<smem>>
    %2 = arith.minsi %arg1, %1 : i32
    %3 = arith.addi %0, %2 : i32
    %c0_i32 = arith.constant 0 : i32
    %c0_i32_0 = arith.constant 0 : i32
    %c0_i32_1 = arith.constant 0 : i32
    return %arg0, %c0_i32, %3, %c0_i32_0 : i32, i32, i32, i32
  }
  func.func @transform_1(%arg0: i32, %arg1: i32, %arg2: memref<6xi32, #tpu.memory_space<smem>>) -> (i32, i32, i32, i32) {
    %c4 = arith.constant 4 : index
    %0 = memref.load %arg2[%c4] : memref<6xi32, #tpu.memory_space<smem>>
    %c5 = arith.constant 5 : index
    %1 = memref.load %arg2[%c5] : memref<6xi32, #tpu.memory_space<smem>>
    %2 = arith.minsi %arg1, %1 : i32
    %3 = arith.addi %0, %2 : i32
    %c0_i32 = arith.constant 0 : i32
    %c0_i32_0 = arith.constant 0 : i32
    %c0_i32_1 = arith.constant 0 : i32
    return %arg0, %c0_i32, %3, %c0_i32_0 : i32, i32, i32, i32
  }
}

</mosaic_0001>

<llo_original>
// kernel: _erase_impl.1
$region0: #{_erase_impl.1}
  #allocation0 [shape = 'u32[]', space=smem, size = 0x4, offset = 0x4, fixed_abs, tag = 'smem constant byte address 0x4 - core index']
  #allocation1 [shape = 'u32[144,128]{1,0:T(1,128)}', space=vmem, size = 0x12000, scoped, tag = 'internal scratch']
  #allocation2 [shape = 's32[1]{0}', space=sflag, size = 0x4, scoped, tag = 'scoped memory for _erase_impl.1']
  #allocation3 [shape = 'u8[512]{0}', space=smem, size = 0x200, scoped, tag = 'prefetched SMEM operand 0']
  %s0 = inlined_call_operand.vmem [shape: s32[6], index: 0, kind: input, shape index: {}]
  %s1 = inlined_call_operand.hbm [shape: f32[2,4,16,16], index: 1, kind: input, shape index: {}, may-alias: {1,2}]
  %s2 = inlined_call_operand.hbm [shape: f32[2,4,16,16], index: 2, kind: output, shape index: {}, may-alias: {1,2}]
  %s3 = sld [smem:[#allocation0]]
  $region41: #{_erase_impl.1} parent=0
    _
  %s5 = ssub.s32 1, %s3
  %s6 = scalar_select 0, %s5, %s3
  %s7 = sshll.u32 %s0, 4
  %s8 = int_to_ptr.vmem [resolvable:$true] %s7
  %10 = dma.vmem_to_smem %s8, 16, [#allocation3], [#allocation2]
  %11 = dma.done [#allocation2], 16
  %12 = sfence
  $region1: #{_erase_impl.1} parent=0
    #allocation4 [shape = 'u8[32768]{0}', space=vmem, size = 0x8000, scoped, tag = 'input window, operand 1']
    #allocation5 [shape = 's32[2]{0}', space=sflag, size = 0x8, scoped, tag = 'scoped memory for _erase_impl.1']
    #allocation6 [shape = 's32[2]{0}', space=sflag, size = 0x8, scoped, tag = 'scoped memory for _erase_impl.1']
    #allocation7 [shape = 'u8[32768]{0}', space=vmem, size = 0x8000, scoped, tag = 'output window, operand 0']
    %13 = vsyncpa [#allocation5], 0
    %s14 = scalar_lea.sflag [#allocation5], 1
    %15 = vsyncpa %s14, 0
    %16 = vsyncpa [#allocation6], 0
    %s17 = scalar_lea.sflag [#allocation6], 1
    %18 = vsyncpa %s17, 0
    loop: start=0, step=1, limit=6
    $region2: #{_erase_impl.1} parent=1 // loop_pre_header
      _
    $region3: #{_erase_impl.1} parent=1 // loop_header
      %s20 = sphi 0, %s24
      %p21 = scmp.ge.s32.totalorder %s20, 6
      %s27 = sphi 0, %s39
      %s28 = sphi 0, %s35
      %s29 = sphi 0, %s27
      %s30 = sphi 0, %s28
      %s31 = sphi 0, %s29
      %s32 = sphi 0, %s30
      %s54 = sphi 0, %s56
      %s57 = sphi 0, %s54
      %s58 = sphi 0, %s57
      %s74 = sphi 0, %s58
      %s92 = sphi 0, %s94
      %s95 = sphi 0, %s92
      %s96 = sphi 0, %s95
      %s112 = sphi 0, %s96
    $region4: #{_erase_impl.1} parent=1 // loop_header_branch
      %23 = sbr.rel (%p21) target = $region8
    $region5: #{_erase_impl.1} parent=1 // loop_body
      %s25 = ssub.s32 %s20, 1
      %s26 = ssub.s32 %s20, 2
      %s33 = sadd.s32 1, %s28
      %p34 = scmp.ge.s32.totalorder %s33, 2
      %s35 = scalar_select %p34, 0, %s33
      %s36 = sadd.s32 1, %s27
      %s37 = scalar_select %p34, %s36, %s27
      %p38 = scmp.ge.s32.totalorder %s37, 2
      %s39 = scalar_select %p38, 0, %s37
      %s40 = sld [smem:[#allocation3 + $0x4]]
      %s41 = sld [smem:[#allocation3 + $0x5]]
      %p42 = scmp.lt.s32.totalorder %s28, %s41
      %s43 = scalar_select %p42, %s28, %s41
      %s44 = sadd.s32 %s40, %s43
      %s45 = sld [smem:[#allocation3 + $0x4]]
      %s46 = sld [smem:[#allocation3 + $0x5]]
      %p47 = scmp.lt.s32.totalorder %s35, %s46
      %s48 = scalar_select %p47, %s35, %s46
      %s49 = sadd.s32 %s45, %s48
      %s50 = ssub.s32 %s27, %s39
      %s51 = ssub.s32 %s44, %s49
      %s52 = sor.u32 %s50, %s51
      %p53 = scmp.eq.s32.totalorder %s52, 0
      %s55 = sadd.s32 %s54, 1
      %s56 = scalar_select %p53, %s54, %s55
      %p59 = pneg %p53
      %p60 = scmp.eq.s32.totalorder %s20, 3
      %p61 = por %p59, %p60
      %p62 = scmp.ne.s32.totalorder %s54, %s57
      %p63 = scmp.eq.s32.totalorder %s20, 0
      %p64 = por %p62, %p63
      %p65 = scmp.ne.s32.totalorder %s54, %s57
      %p66 = scmp.eq.s32.totalorder %s25, 3
      %p67 = por %p65, %p66
      %p68 = scmp.ne.s32.totalorder %s57, %s58
      %p69 = scmp.eq.s32.totalorder %s25, 0
      %p70 = por %p68, %p69
      %p71 = scmp.ne.s32.totalorder %s57, %s58
      %p72 = scmp.eq.s32.totalorder %s26, 3
      %p73 = por %p71, %p72
      %p75 = scmp.ne.s32.totalorder %s58, %s74
      %p76 = scmp.eq.s32.totalorder %s26, 0
      %p77 = por %p75, %p76
      %s78 = sld [smem:[#allocation3 + $0x4]]
      %s79 = sld [smem:[#allocation3 + $0x5]]
      %p80 = scmp.lt.s32.totalorder %s28, %s79
      %s81 = scalar_select %p80, %s28, %s79
      %s82 = sadd.s32 %s78, %s81
      %s83 = sld [smem:[#allocation3 + $0x4]]
      %s84 = sld [smem:[#allocation3 + $0x5]]
      %p85 = scmp.lt.s32.totalorder %s35, %s84
      %s86 = scalar_select %p85, %s35, %s84
      %s87 = sadd.s32 %s83, %s86
      %s88 = ssub.s32 %s27, %s39
      %s89 = ssub.s32 %s82, %s87
      %s90 = sor.u32 %s88, %s89
      %p91 = scmp.eq.s32.totalorder %s90, 0
      %s93 = sadd.s32 %s92, 1
      %s94 = scalar_select %p91, %s92, %s93
      %p97 = pneg %p91
      %p98 = scmp.eq.s32.totalorder %s20, 3
      %p99 = por %p97, %p98
      %p100 = scmp.ne.s32.totalorder %s92, %s95
      %p101 = scmp.eq.s32.totalorder %s20, 0
      %p102 = por %p100, %p101
      %p103 = scmp.ne.s32.totalorder %s92, %s95
      %p104 = scmp.eq.s32.totalorder %s25, 3
      %p105 = por %p103, %p104
      %p106 = scmp.ne.s32.totalorder %s95, %s96
      %p107 = scmp.eq.s32.totalorder %s25, 0
      %p108 = por %p106, %p107
      %p109 = scmp.ne.s32.totalorder %s95, %s96
      %p110 = scmp.eq.s32.totalorder %s26, 3
      %p111 = por %p109, %p110
      %p113 = scmp.ne.s32.totalorder %s96, %s112
      %p114 = scmp.eq.s32.totalorder %s26, 0
      %p115 = por %p113, %p114
      %p116 = scmp.le.s32.totalorder 1, %s20
      %p117 = scmp.lt.s32.totalorder %s20, 5
      %p118 = pnand %p116, %p117
      %p119 = pneg %p118
      // Predicated region
      $region9: #{_erase_impl.1} parent=5 // pred_check
        _
      $region10: #{_erase_impl.1} parent=5 // pred_check_branch
        %121 = sbr.rel (%p118) target = $region12
      $region11: #{_erase_impl.1} parent=5 // pred_region
        %s122 = ssub.s32 %s20, 1
      $region12: #{_erase_impl.1} parent=5 // pred_fallthru
        _
      %p123 = scmp.lt.s32.totalorder %s20, 4
      // Predicated region
      $region13: #{_erase_impl.1} parent=5 // pred_check
        %p124 = pneg %p123
      $region14: #{_erase_impl.1} parent=5 // pred_check_branch
        %126 = sbr.rel (%p124) target = $region16
      $region15: #{_erase_impl.1} parent=5 // pred_region
        // Predicated region
        $region17: #{_erase_impl.1} parent=15 // pred_check
          %p127 = pneg %p64
        $region18: #{_erase_impl.1} parent=15 // pred_check_branch
          %129 = sbr.rel (%p127) target = $region20
        $region19: #{_erase_impl.1} parent=15 // pred_region
          %s130 = sand.u32 %s54, 1
          %s131 = scalar_lea.sflag [#allocation5], %s130
          %s132 = sand.u32 %s54, 1
          %s133 = smul.addr %s132, 32
          %s134 = scalar_lea.vmem [#allocation4], %s133
          %s135 = sld [smem:[#allocation3 + $0x4]]
          %s136 = sld [smem:[#allocation3 + $0x5]]
          %p137 = scmp.lt.s32.totalorder %s28, %s136
          %s138 = scalar_select %p137, %s28, %s136
          %s139 = sadd.s32 %s135, %s138
          %s141 = ssub.s32 512, 512
          %142 = vsyncadd %s131, %s141
          %s143 = smul.addr %s27, 8
          %s144 = sadd.s32 %s139, %s143
          %s145 = smul.addr %s144, 128
          %s146 = scalar_lea.hbm %s1, %s145
          %s147 = sshll.u32 %s134, 4
          %s148 = int_to_ptr.vmem [resolvable:$true] %s147
          %153 = dma.hbm_to_vmem [thread:$0]  %s146, 512, %s148, %s131, 256, 128, 8
        $region20: #{_erase_impl.1} parent=15 // pred_fallthru
          _
      $region16: #{_erase_impl.1} parent=5 // pred_fallthru
        _
      %p154 = scmp.le.s32.totalorder 1, %s20
      %p155 = scmp.lt.s32.totalorder %s20, 5
      %p156 = pnand %p154, %p155
      %p157 = pneg %p156
      // Predicated region
      $region21: #{_erase_impl.1} parent=5 // pred_check
        _
      $region22: #{_erase_impl.1} parent=5 // pred_check_branch
        %159 = sbr.rel (%p156) target = $region24
      $region23: #{_erase_impl.1} parent=5 // pred_region
        %s160 = ssub.s32 %s20, 1
        %s161 = sand.u32 %s57, 1
        %s162 = scalar_lea.sflag [#allocation5], %s161
        %s163 = sand.u32 %s57, 1
        %s164 = smul.addr %s163, 32
        %s165 = scalar_lea.vmem [#allocation4], %s164
        // Predicated region
        $region25: #{_erase_impl.1} parent=23 // pred_check
          %p166 = pneg %p70
        $region26: #{_erase_impl.1} parent=23 // pred_check_branch
          %168 = sbr.rel (%p166) target = $region28
        $region27: #{_erase_impl.1} parent=23 // pred_region
          %169 = dma.done %s162, 512
        $region28: #{_erase_impl.1} parent=23 // pred_fallthru
          _
        %s170 = sand.u32 %s57, 1
        %s171 = scalar_lea.sflag [#allocation5], %s170
        %s172 = sand.u32 %s57, 1
        %s173 = smul.addr %s172, 32
        %s174 = scalar_lea.vmem [#allocation4], %s173
        %p175 = pneg %p70
        %p176 = pneg %p67
        %p177 = pneg %p108
        %p178 = pneg %p105
        %s179 = sand.u32 %s95, 1
        %s180 = scalar_lea.sflag [#allocation6], %s179
        %s181 = sand.u32 %s95, 1
        %s182 = smul.addr %s181, 32
        %s183 = scalar_lea.vmem [#allocation7], %s182
        %s184 = sld [smem:[#allocation3 + $0x4]]
        %s185 = sld [smem:[#allocation3 + $0x5]]
        %p186 = scmp.lt.s32.totalorder %s30, %s185
        %s187 = scalar_select %p186, %s30, %s185
        %s188 = sadd.s32 %s184, %s187
        %s189 = sld [smem:[#allocation3 + $0x4]]
        %s190 = sld [smem:[#allocation3 + $0x5]]
        %p191 = scmp.lt.s32.totalorder %s30, %s190
        %s192 = scalar_select %p191, %s30, %s190
        %s193 = sadd.s32 %s189, %s192
        %s194 = sld [smem:[#allocation3]]
        %s195 = sld [smem:[#allocation3 + $0x1]]
        %s196 = sld [smem:[#allocation3 + $0x2]]
        %s197 = sld [smem:[#allocation3 + $0x3]]
        %s198 = sld [smem:[#allocation3 + $0x4]]
        %s199 = sld [smem:[#allocation3 + $0x5]]
        %p200 = scmp.lt.s32.totalorder %s30, %s199
        %s201 = scalar_select %p200, %s30, %s199
        %s202 = sadd.s32 %s198, %s201
        %s203 = smul.u32 %s202, 8
        %v204 = vlaneseq
        %v205 = vshrl.u32 %v204, 7
        %v206 = vstv %s203
        %v207 = vadd.s32 %v206, %v205
        %v208 = vlaneseq
        %v209 = vand.u32 %v208, 127
        %v210 = vstv %s194
        %vm211 = vcmp.ge.s32.totalorder %v207, %v210
        %s212 = sadd.s32 %s194, %s196
        %v213 = vstv %s212
        %vm214 = vcmp.lt.s32.totalorder %v207, %v213
        %vm215 = vmand %vm211, %vm214
        %v216 = vstv %s195
        %vm217 = vcmp.ge.s32.totalorder %v209, %v216
        %vm218 = vmand %vm215, %vm217
        %s219 = sadd.s32 %s195, %s197
        %v220 = vstv %s219
        %vm221 = vcmp.lt.s32.totalorder %v209, %v220
        %vm222 = vmand %vm218, %vm221
        %v223 = vld [vmem:[%s165] sm:$0xff]
        %v224 = vsel %vm222, 0.0, %v223
        %vm225 = vcmask 130048
        %226 = vst.msk [vmem:[%s183] sm:$0xff] %vm225, %v224
        %s227 = scalar_lea.vmem %s165, 8 [#allocation4]
        %v228 = vld [vmem:[%s227] sm:$0xff]
        %v229 = vsel %vm222, 0.0, %v228
        %s230 = scalar_lea.vmem %s183, 8 [#allocation7]
        %231 = vst.msk [vmem:[%s230] sm:$0xff] %vm225, %v229
        %s232 = scalar_lea.vmem %s165, 16 [#allocation4]
        %v233 = vld [vmem:[%s232] sm:$0xff]
        %v234 = vsel %vm222, 0.0, %v233
        %s235 = scalar_lea.vmem %s183, 16 [#allocation7]
        %236 = vst.msk [vmem:[%s235] sm:$0xff] %vm225, %v234
        %s237 = scalar_lea.vmem %s165, 24 [#allocation4]
        %v238 = vld [vmem:[%s237] sm:$0xff]
        %v239 = vsel %vm222, 0.0, %v238
        %s240 = scalar_lea.vmem %s183, 24 [#allocation7]
        %241 = vst.msk [vmem:[%s240] sm:$0xff] %vm225, %v239
        %s242 = sand.u32 %s95, 1
        %s243 = scalar_lea.sflag [#allocation6], %s242
        %s244 = sand.u32 %s95, 1
        %s245 = smul.addr %s244, 32
        %s246 = scalar_lea.vmem [#allocation7], %s245
        // Predicated region
        $region29: #{_erase_impl.1} parent=23 // pred_check
          %p247 = pneg %p105
        $region30: #{_erase_impl.1} parent=23 // pred_check_branch
          %249 = sbr.rel (%p247) target = $region32
        $region31: #{_erase_impl.1} parent=23 // pred_region
          %s250 = sld [smem:[#allocation3 + $0x4]]
          %s251 = sld [smem:[#allocation3 + $0x5]]
          %p252 = scmp.lt.s32.totalorder %s30, %s251
          %s253 = scalar_select %p252, %s30, %s251
          %s254 = sadd.s32 %s250, %s253
          %s256 = ssub.s32 512, 512
          %257 = vsyncadd %s243, %s256
          %s258 = smul.addr %s29, 8
          %s259 = sadd.s32 %s254, %s258
          %s260 = smul.addr %s259, 128
          %s261 = scalar_lea.hbm %s2, %s260
          %s262 = sshll.u32 %s246, 4
          %s263 = int_to_ptr.vmem [resolvable:$true] %s262
          %268 = dma.vmem_to_hbm [thread:$0]  %s263, 512, %s261, %s243, 128, 256, 8
        $region32: #{_erase_impl.1} parent=23 // pred_fallthru
          _
      $region24: #{_erase_impl.1} parent=5 // pred_fallthru
        _
      %p269 = scmp.le.s32.totalorder 2, %s20
      // Predicated region
      $region33: #{_erase_impl.1} parent=5 // pred_check
        %p270 = pneg %p269
      $region34: #{_erase_impl.1} parent=5 // pred_check_branch
        %272 = sbr.rel (%p270) target = $region36
      $region35: #{_erase_impl.1} parent=5 // pred_region
        %s273 = ssub.s32 %s20, 2
        // Predicated region
        $region37: #{_erase_impl.1} parent=35 // pred_check
          %p274 = pneg %p111
        $region38: #{_erase_impl.1} parent=35 // pred_check_branch
          %276 = sbr.rel (%p274) target = $region40
        $region39: #{_erase_impl.1} parent=35 // pred_region
          %s277 = sand.u32 %s96, 1
          %s278 = scalar_lea.sflag [#allocation6], %s277
          %s279 = sand.u32 %s96, 1
          %s280 = smul.addr %s279, 32
          %s281 = scalar_lea.vmem [#allocation7], %s280
          %282 = dma.done %s278, 512
        $region40: #{_erase_impl.1} parent=35 // pred_fallthru
          _
      $region36: #{_erase_impl.1} parent=5 // pred_fallthru
        _
    $region6: #{_erase_impl.1} parent=1 // loop_footer
      %s24 = sadd.s32 1, %s20
    $region7: #{_erase_impl.1} parent=1 // loop_footer_branch
      %19 = sbr.rel target = $region3
    $region8: #{_erase_impl.1} parent=1 // loop_exit
      _
    %283 = vsyncpa [#allocation5], 1
    %s284 = scalar_lea.sflag [#allocation5], 1
    %285 = vsyncpa %s284, 1
    %286 = vsyncpa [#allocation6], 1
    %s287 = scalar_lea.sflag [#allocation6], 1
    %288 = vsyncpa %s287, 1

</llo_original>
